<compile_context>
chip_gen: v5e
topology: v5e:2x2
jax: 0.10.0
libtpu: 0.0.40
codegen_flags: <defaults>
</compile_context>

<pallas_src>
import functools

import jax
import jax.numpy as jnp
from jax.experimental import pallas as pl
from jax.experimental.pallas import tpu as pltpu


def _round_up(x, m):
    return (x + m - 1) // m * m


def _l3_kernel(x_ref, w_ref, b_ref, o_ref):
    # out = l3(x): one matmul on the MXU with f32 accumulation, bias add in f32.
    acc = jnp.dot(x_ref[...], w_ref[...], preferred_element_type=jnp.float32)
    o_ref[...] = (acc + b_ref[...]).astype(o_ref.dtype)


def prepare_l3_params(params, compute_dtype=jnp.float32):
    """One-time (cacheable) packing of the l3 weight/bias for the kernel.

    Returns (w_packed, b_packed, num_classes):
      w_packed: (K, N_pad) = w3.T, lane-padded to a multiple of 128, in compute_dtype.
      b_packed: (1, N_pad) f32 bias (padding lanes are zero).
    Hoisted out of the per-call path per the perf review (no per-forward transpose /
    pad / cast of the weight).
    """
    w3, b3 = params["w3"], params["b3"]          # (numClasses, hidden), (numClasses,)
    N, K = w3.shape
    N_pad = _round_up(N, 128)                    # lane-dense output / unmasked vst
    w_p = jnp.zeros((K, N_pad), compute_dtype).at[:, :N].set(w3.T.astype(compute_dtype))
    b_p = jnp.zeros((1, N_pad), jnp.float32).at[:, :N].set(b3.astype(jnp.float32))
    return w_p, b_p, N


def _vmem_limit_bytes(TM, K, TN, compute_bytes):
    # Double-buffered pipelined tiles: x (TM,K), w (K,TN), bias (1,TN), out f32 (TM,TN).
    tile_bytes = (TM * K + K * TN) * compute_bytes + TN * 4 + TM * TN * 4
    # 2x for double buffering + 2 MiB headroom; clamp to [8 MiB, 64 MiB]
    # (64 MiB = v7x physical VMEM per TensorCore; v5e/v6e have 128 MiB).
    return int(min(64 * 2**20, max(8 * 2**20, 2 * tile_bytes + 2 * 2**20)))


@functools.partial(jax.jit, static_argnames=("num_classes", "tile_m", "tile_n"))
def neural_network_forward(x, w_packed, b_packed, num_classes, *,
                           tile_m=256, tile_n=512):
    """Forward pass of the PyTorch NeuralNetwork module: returns l3(x) + b3.

    x:        (B, inputSize)   -- inputSize must equal hiddenSize (as in the module).
    w_packed: (K, N_pad)       -- from prepare_l3_params (cached across calls).
    b_packed: (1, N_pad) f32.
    """
    B, K = x.shape
    Kw, N_pad = w_packed.shape
    assert K == Kw, "inputSize must equal hiddenSize for this module's forward to run"

    compute_dtype = w_packed.dtype
    x_c = x.astype(compute_dtype) if x.dtype != compute_dtype else x  # no padded copy

    TM = min(tile_m, _round_up(B, 8))            # sublane-aligned batch tile
    TN = min(tile_n, N_pad)                      # <=512 lanes per step, multiple of 128
    grid = (pl.cdiv(B, TM), pl.cdiv(N_pad, TN))  # ragged last batch tile is fine

    out_p = pl.pallas_call(
        _l3_kernel,
        out_shape=jax.ShapeDtypeStruct((B, N_pad), jnp.float32),
        grid_spec=pltpu.PrefetchScalarGridSpec(
            num_scalar_prefetch=0,
            grid=grid,
            in_specs=[
                pl.BlockSpec((TM, K), lambda i, j: (i, 0)),     # x tile, full (unpadded) K
                pl.BlockSpec((K, TN), lambda i, j: (0, j)),     # w3^T N-slice
                pl.BlockSpec((1, TN), lambda i, j: (0, j)),     # bias N-slice
            ],
            out_specs=pl.BlockSpec((TM, TN), lambda i, j: (i, j)),
        ),
        compiler_params=pltpu.CompilerParams(
            # Both axes independent -> megacore sharding on v7x (over N even at small B).
            dimension_semantics=("parallel", "parallel"),
            vmem_limit_bytes=_vmem_limit_bytes(TM, K, TN, jnp.dtype(compute_dtype).itemsize),
        ),
    )(x_c, w_packed, b_packed)

    # Slice off the lane padding (and any ragged-tile rows); cast back to input dtype.
    return out_p[:, :num_classes].astype(x.dtype)


def init_params(key, input_size, hidden_size, num_classes):
    """Deterministic synthetic parameters, PyTorch Linear convention (out_features, in).

    w1/b1/w2/b2 exist on the module but are dead in its forward; they are kept here for
    fidelity and are never passed to the kernel.
    """
    k1, k2, k3, k4, k5, k6 = jax.random.split(key, 6)
    s = lambda fan_in: 1.0 / jnp.sqrt(fan_in)
    return {
        "w1": jax.random.uniform(k1, (hidden_size, input_size), jnp.float32,
                                 -s(input_size), s(input_size)),
        "b1": jax.random.uniform(k2, (hidden_size,), jnp.float32,
                                 -s(input_size), s(input_size)),
        "w2": jax.random.uniform(k3, (hidden_size, hidden_size), jnp.float32,
                                 -s(hidden_size), s(hidden_size)),
        "b2": jax.random.uniform(k4, (hidden_size,), jnp.float32,
                                 -s(hidden_size), s(hidden_size)),
        "w3": jax.random.uniform(k5, (num_classes, hidden_size), jnp.float32,
                                 -s(hidden_size), s(hidden_size)),
        "b3": jax.random.uniform(k6, (num_classes,), jnp.float32,
                                 -s(hidden_size), s(hidden_size)),
    }


if __name__ == "__main__":
    # inputSize must equal hiddenSize for the original module's forward to run.
    batch, input_size, hidden_size, num_classes = 8, 32, 32, 8

    key = jax.random.PRNGKey(0)
    x = jax.random.normal(key, (batch, input_size), dtype=jnp.float32)
    params = init_params(jax.random.PRNGKey(42), input_size, hidden_size, num_classes)

    # Weight/bias packing is done ONCE (f32 compute at this small, overhead-bound size;
    # pass compute_dtype=jnp.bfloat16 for large MXU/BW-bound shapes).
    w_packed, b_packed, n_cls = prepare_l3_params(params, compute_dtype=jnp.float32)

    out = neural_network_forward(x, w_packed, b_packed, n_cls)
    out = jax.block_until_ready(out)
    assert out.shape == (batch, num_classes)

    # Reference: exact PyTorch-equivalent result, l3(x) + b3 (l1/l2/relu are dead code).
    ref = x @ params["w3"].T + params["b3"]
    assert jnp.allclose(out, ref, atol=1e-3, rtol=1e-3), (
        float(jnp.max(jnp.abs(out - ref))))

    print("KERNEL_OK")
</pallas_src>

<mosaic_0001>
module attributes {stable_mosaic.version = 11 : i64} {
  func.func @_l3_kernel(%arg0: i32, %arg1: i32, %arg2: memref<8x32xf32, #tpu.memory_space<vmem>>, %arg3: memref<32x128xf32, #tpu.memory_space<vmem>>, %arg4: memref<1x128xf32, #tpu.memory_space<vmem>>, %arg5: memref<8x128xf32, #tpu.memory_space<vmem>>) attributes {dimension_semantics = [#tpu.dimension_semantics<parallel>, #tpu.dimension_semantics<parallel>], iteration_bounds = array<i64: 1, 1>, scalar_prefetch = 0 : i64, scratch_operands = 0 : i64, tpu.core_type = #tpu.core_type<tc>, window_params = [{transform_indices = @transform_0, window_bounds = array<i64: 8, 32>}, {transform_indices = @transform_1, window_bounds = array<i64: 32, 128>}, {transform_indices = @transform_2, window_bounds = array<i64: 1, 128>}, {transform_indices = @transform_3, window_bounds = array<i64: 8, 128>}]} {
    %c0 = arith.constant 0 : index
    %c0_0 = arith.constant 0 : index
    %0 = vector.load %arg2[%c0, %c0_0] : memref<8x32xf32, #tpu.memory_space<vmem>>, vector<8x32xf32>
    %c0_1 = arith.constant 0 : index
    %c0_2 = arith.constant 0 : index
    %1 = vector.load %arg3[%c0_1, %c0_2] : memref<32x128xf32, #tpu.memory_space<vmem>>, vector<32x128xf32>
    %cst = arith.constant dense<0.000000e+00> : vector<8x128xf32>
    %2 = tpu.matmul %0, %1, %cst {dimension_numbers = #tpu.dot_dimension_numbers<[1], [0], [0], [1], [0, 0, 1, 1], [], []>} : vector<8x32xf32>, vector<32x128xf32>, vector<8x128xf32> -> vector<8x128xf32>
    %c0_3 = arith.constant 0 : index
    %c0_4 = arith.constant 0 : index
    %3 = vector.load %arg4[%c0_3, %c0_4] : memref<1x128xf32, #tpu.memory_space<vmem>>, vector<1x128xf32>
    %4 = vector.broadcast %3 : vector<1x128xf32> to vector<8x128xf32>
    %5 = arith.addf %2, %4 : vector<8x128xf32>
    %c0_5 = arith.constant 0 : index
    %c0_6 = arith.constant 0 : index
    %6 = vector.load %arg5[%c0_5, %c0_6] : memref<8x128xf32, #tpu.memory_space<vmem>>, vector<8x128xf32>
    tpu.vector_store %arg5[%c0_5, %c0_6], %5 {strides = array<i32>} : memref<8x128xf32, #tpu.memory_space<vmem>>, vector<8x128xf32>,
    return
  }
  func.func @transform_0(%arg0: i32, %arg1: i32) -> (i32, i32) {
    %c0_i32 = arith.constant 0 : i32
    %c0_i32_0 = arith.constant 0 : i32
    return %arg0, %c0_i32 : i32, i32
  }
  func.func @transform_1(%arg0: i32, %arg1: i32) -> (i32, i32) {
    %c0_i32 = arith.constant 0 : i32
    %c0_i32_0 = arith.constant 0 : i32
    return %c0_i32, %arg1 : i32, i32
  }
  func.func @transform_2(%arg0: i32, %arg1: i32) -> (i32, i32) {
    %c0_i32 = arith.constant 0 : i32
    %c0_i32_0 = arith.constant 0 : i32
    return %c0_i32, %arg1 : i32, i32
  }
  func.func @transform_3(%arg0: i32, %arg1: i32) -> (i32, i32) {
    %c0_i32 = arith.constant 0 : i32
    return %arg0, %arg1 : i32, i32
  }
}

</mosaic_0001>

<llo_original>
// kernel: neural_network_forward.1
$region0: #{neural_network_forward.1}
  #allocation0 [shape = 'u32[]', space=smem, size = 0x4, offset = 0x4, fixed_abs, tag = 'smem constant byte address 0x4 - core index']
  #allocation1 [shape = 'u32[72,128]{1,0:T(1,128)}', space=vmem, size = 0x9000, scoped, tag = 'internal scratch']
  %s0 = inlined_call_operand.hbm [shape: f32[8,32], index: 0, kind: input, shape index: {}]
  %s1 = inlined_call_operand.hbm [shape: f32[32,128], index: 1, kind: input, shape index: {}]
  %s2 = inlined_call_operand.vmem [shape: f32[1,128], index: 2, kind: input, shape index: {}]
  %s3 = inlined_call_operand.hbm [shape: f32[8,128], index: 3, kind: output, shape index: {}]
  %s4 = sld [smem:[#allocation0]]
  $region30: #{neural_network_forward.1} parent=0
    _
  %s6 = ssub.s32 1, %s4
  %s7 = scalar_select 0, %s6, %s4
  $region1: #{neural_network_forward.1} parent=0
    #allocation2 [shape = 'u8[4096]{0}', space=vmem, size = 0x1000, scoped, tag = 'input window, operand 0, single buffered']
    #allocation3 [shape = 's32[1]{0}', space=sflag, size = 0x4, scoped, tag = 'scoped memory for neural_network_forward.1']
    #allocation4 [shape = 's32[1]{0}', space=sflag, size = 0x4, scoped, tag = 'scoped memory for neural_network_forward.1']
    #allocation5 [shape = 'u8[16384]{0}', space=vmem, size = 0x4000, scoped, tag = 'input window, operand 1, single buffered']
    #allocation6 [shape = 's32[1]{0}', space=sflag, size = 0x4, scoped, tag = 'scoped memory for neural_network_forward.1']
    #allocation7 [shape = 'u8[4096]{0}', space=vmem, size = 0x1000, scoped, tag = 'output window, operand 0, single buffered']
    %8 = vsyncpa [#allocation3], 0
    %9 = vsyncpa [#allocation6], 0
    %10 = vsyncpa [#allocation4], 0
    // Predicated region
    $region2: #{neural_network_forward.1} parent=1 // pred_check
      _
    $region3: #{neural_network_forward.1} parent=1 // pred_check_branch
      %12 = sbr.rel (0) target = $region5
    $region4: #{neural_network_forward.1} parent=1 // pred_region
      %14 = vsyncadd [#allocation3], 0
      %s16 = sshll.u32 %s0, 4
      %s17 = int_to_ptr.hbm [resolvable:$true] %s16
      %s18 = sshll.u32 [#allocation2], 4
      %s19 = int_to_ptr.vmem [resolvable:$true] %s18
      %21 = dma.hbm_to_vmem [thread:$0]  %s17, 128, %s19, [#allocation3]
    $region5: #{neural_network_forward.1} parent=1 // pred_fallthru
      _
    // Predicated region
    $region6: #{neural_network_forward.1} parent=1 // pred_check
      _
    $region7: #{neural_network_forward.1} parent=1 // pred_check_branch
      %23 = sbr.rel (0) target = $region9
    $region8: #{neural_network_forward.1} parent=1 // pred_region
      %25 = vsyncadd [#allocation6], 0
      %s26 = sshll.u32 %s1, 4
      %s27 = int_to_ptr.hbm [resolvable:$true] %s26
      %s28 = sshll.u32 [#allocation5], 4
      %s29 = int_to_ptr.vmem [resolvable:$true] %s28
      %34 = dma.hbm_to_vmem [thread:$0]  %s27, 512, %s29, [#allocation6], 128, 128, 8
    $region9: #{neural_network_forward.1} parent=1 // pred_fallthru
      _
    // Predicated region
    $region10: #{neural_network_forward.1} parent=1 // pred_check
      _
    $region11: #{neural_network_forward.1} parent=1 // pred_check_branch
      %36 = sbr.rel (0) target = $region13
    $region12: #{neural_network_forward.1} parent=1 // pred_region
      _
    $region13: #{neural_network_forward.1} parent=1 // pred_fallthru
      _
    // Predicated region
    $region14: #{neural_network_forward.1} parent=1 // pred_check
      _
    $region15: #{neural_network_forward.1} parent=1 // pred_check_branch
      %38 = sbr.rel (0) target = $region17
    $region16: #{neural_network_forward.1} parent=1 // pred_region
      %40 = dma.done [#allocation3], 128
    $region17: #{neural_network_forward.1} parent=1 // pred_fallthru
      _
    // Predicated region
    $region18: #{neural_network_forward.1} parent=1 // pred_check
      _
    $region19: #{neural_network_forward.1} parent=1 // pred_check_branch
      %42 = sbr.rel (0) target = $region21
    $region20: #{neural_network_forward.1} parent=1 // pred_region
      %44 = dma.done [#allocation6], 512
    $region21: #{neural_network_forward.1} parent=1 // pred_fallthru
      _
    %v45 = vld [vmem:[#allocation2] sm:$0xff]
    %v46 = vld [vmem:[#allocation5] sm:$0xff]
    %v47 = vld [vmem:[#allocation5 + $0x8] sm:$0xff]
    %v48 = vld [vmem:[#allocation5 + $0x10] sm:$0xff]
    %v49 = vld [vmem:[#allocation5 + $0x18] sm:$0xff]
    %v50 = vld [vmem:[%s2] sm:$0x1]
    %v52 = vperm.slane %v50, 0
    %vm54 = vcmask 261120
    %v56 = vsel %vm54, %v45, 0
    %58 = vmatpush.msra.mxu0 0.0
    %59 = vmatpush.msra.mxu0 0.0
    %60 = vmatpush.msra.mxu0 0.0
    %61 = vmatpush.msra.mxu0 0.0
    %62 = vmatpush.msra.mxu0 0.0
    %63 = vmatpush.msra.mxu0 0.0
    %64 = vmatpush.msra.mxu0 0.0
    %65 = vmatpush.msra.mxu0 0.0
    %66 = vmatpush.msra.mxu0 0.0
    %67 = vmatpush.msra.mxu0 0.0
    %68 = vmatpush.msra.mxu0 0.0
    %69 = vmatpush.msra.mxu0 0.0
    %70 = vmatpush.msra.mxu0 %v49
    %71 = vmatpush.msra.mxu0 %v48
    %72 = vmatpush.msra.mxu0 %v47
    %73 = vmatpush.msra.mxu0 %v46
    %74 = vmatmul.f32.gmra.mxu0 %v56
    %v75 = vpop.f32.mrf.mxu0
    %v76 = vadd.f32 %v52, %v75
    %77 = vdwg.mxu0
    %78 = vst [vmem:[#allocation7] sm:$0xff] %v76
    // Predicated region
    $region22: #{neural_network_forward.1} parent=1 // pred_check
      _
    $region23: #{neural_network_forward.1} parent=1 // pred_check_branch
      %80 = sbr.rel (0) target = $region25
    $region24: #{neural_network_forward.1} parent=1 // pred_region
      %82 = vsyncadd [#allocation4], 0
      %s84 = sshll.u32 [#allocation7], 4
      %s85 = int_to_ptr.vmem [resolvable:$true] %s84
      %s86 = sshll.u32 %s3, 4
      %s87 = int_to_ptr.hbm [resolvable:$true] %s86
      %89 = dma.vmem_to_hbm [thread:$0]  %s85, 128, %s87, [#allocation4]
    $region25: #{neural_network_forward.1} parent=1 // pred_fallthru
      _
    // Predicated region
    $region26: #{neural_network_forward.1} parent=1 // pred_check
      _
    $region27: #{neural_network_forward.1} parent=1 // pred_check_branch
      %91 = sbr.rel (0) target = $region29
    $region28: #{neural_network_forward.1} parent=1 // pred_region
      %93 = dma.done [#allocation4], 128
    $region29: #{neural_network_forward.1} parent=1 // pred_fallthru
      _
    %94 = vsyncpa [#allocation3], 1
    %95 = vsyncpa [#allocation6], 1
    %96 = vsyncpa [#allocation4], 1

</llo_original>
